<compile_context>
chip_gen: v7x
topology: tpu7x:2x2x1
jax: 0.10.0
libtpu: 0.0.40
codegen_flags: <defaults>
</compile_context>

<pallas_src>
import numpy as np

import jax
import jax.numpy as jnp
from jax.experimental import pallas as pl
from jax.experimental.pallas import tpu as pltpu

BN_EPS = 1e-5
LANE = 128
TARGET_BLOCK_N = 512                 # review: 512-2048 amortizes per-step overhead
VMEM_SOFT_CAP = 24 * 1024 * 1024     # working-set target; safe on v7x (64 MiB VMEM)


# ---------------------------- Pallas kernel ---------------------------------
def _ffn_kernel(x_ref, w1_ref, b1_ref, w2_ref, b2_ref, o_ref):
    # x_ref:  (D, block_n) slab of positions (batch squeezed or folded into lanes)
    # w1_ref: (H, D) bf16, b1_ref: (H, 1) f32
    # w2_ref: (D, H) bf16, b2_ref: (D, 1) f32
    x = x_ref[...].astype(jnp.bfloat16)

    # hidden = ReLU(W1 @ x + b1), f32 accumulation on the MXU
    h = jnp.dot(w1_ref[...], x, preferred_element_type=jnp.float32)
    h = jnp.maximum(h + b1_ref[...], 0.0)

    # out = W2 @ hidden + b2
    y = jnp.dot(w2_ref[...], h.astype(jnp.bfloat16),
                preferred_element_type=jnp.float32)
    o_ref[...] = (y + b2_ref[...]).astype(o_ref.dtype)


# ------------------------------ sizing helpers --------------------------------
def _vmem_need_bytes(D, H, block_n, x_bytes, out_bytes):
    io = 2 * D * block_n * x_bytes + 2 * D * block_n * out_bytes   # double-buffered in/out
    weights = 2 * (H * D * 2 + D * H * 2 + H * 4 + D * 4)          # resident (still 2-buffered)
    temps = H * block_n * (4 + 2) + D * block_n * (2 + 4)          # f32 hidden + bf16 copies
    return io + weights + temps


def _pick_block_n(D, H, n_cols, x_bytes, out_bytes):
    bn = min(TARGET_BLOCK_N, pl.cdiv(n_cols, LANE) * LANE)
    bn = max(LANE, (bn // LANE) * LANE)
    while bn > LANE and _vmem_need_bytes(D, H, bn, x_bytes, out_bytes) > VMEM_SOFT_CAP:
        bn -= LANE
    return bn


def _vmem_limit(D, H, block_n, x_bytes, out_bytes):
    need = _vmem_need_bytes(D, H, block_n, x_bytes, out_bytes)
    return int(min(64 * 1024 * 1024, max(2 * need, 16 * 1024 * 1024)))


# ------------------------------ pallas_call glue ------------------------------
def _run_ffn(x_in, w1, b1, w2, b2, *, grid, x_spec, o_spec, out_shape, out_dtype,
             dim_sem, flops, bytes_accessed, vmem_limit):
    H, D = w1.shape
    return pl.pallas_call(
        _ffn_kernel,
        out_shape=jax.ShapeDtypeStruct(out_shape, out_dtype),
        grid_spec=pltpu.PrefetchScalarGridSpec(
            num_scalar_prefetch=0,
            grid=grid,
            in_specs=[
                x_spec,
                pl.BlockSpec((H, D), lambda *idx: (0, 0)),   # W1 (resident)
                pl.BlockSpec((H, 1), lambda *idx: (0, 0)),   # b1
                pl.BlockSpec((D, H), lambda *idx: (0, 0)),   # W2 (resident)
                pl.BlockSpec((D, 1), lambda *idx: (0, 0)),   # b2
            ],
            out_specs=o_spec,
        ),
        compiler_params=pltpu.CompilerParams(
            dimension_semantics=dim_sem,
            vmem_limit_bytes=vmem_limit),
        cost_estimate=pl.CostEstimate(
            flops=flops, transcendentals=0, bytes_accessed=bytes_accessed),
    )(x_in, w1, b1, w2, b2)


# ------------------------------ wrapper ---------------------------------------
def fuse_conv_bn(w, b, gamma, beta, mean, var, eps=BN_EPS):
    """Fold Conv2d(1x1) weight (O,I) + bias (O,) and eval-mode BN into affine."""
    scale = gamma / jnp.sqrt(var + eps)
    w_eff = w * scale[:, None]
    b_eff = (b - mean) * scale + beta
    return w_eff.astype(jnp.float32), b_eff[:, None].astype(jnp.float32)


def positionwise_feed_forward(xs, params, *, out_dtype=jnp.bfloat16):
    """xs: (B, D, 1, T) NCHW.  Returns (B, D, 1, T) in out_dtype."""
    B, D, _, T = xs.shape

    w1, b1 = fuse_conv_bn(*params["conv1"])   # (H, D), (H, 1)
    w2, b2 = fuse_conv_bn(*params["conv2"])   # (D, H), (D, 1)
    H = w1.shape[0]
    w1 = w1.astype(jnp.bfloat16)
    w2 = w2.astype(jnp.bfloat16)

    out_bytes = np.dtype(out_dtype).itemsize
    x3 = xs.reshape(B, D, T)                  # drop H==1 (free reshape)

    if T >= LANE:
        # --- Direct layout: no wrapper transposes; grid over (batch, lane blocks).
        x_bytes = np.dtype(xs.dtype).itemsize  # read f32 directly, cast in-kernel
        block_n = _pick_block_n(D, H, T, x_bytes, out_bytes)
        t_pad = pl.cdiv(T, block_n) * block_n
        if t_pad != T:
            x3 = jnp.pad(x3, ((0, 0), (0, 0), (0, t_pad - T)))
        n_total = B * t_pad
        out = _run_ffn(
            x3, w1, b1, w2, b2,
            grid=(B, t_pad // block_n),
            x_spec=pl.BlockSpec((pl.Squeezed(), D, block_n), lambda b, j: (b, 0, j)),
            o_spec=pl.BlockSpec((pl.Squeezed(), D, block_n), lambda b, j: (b, 0, j)),
            out_shape=(B, D, t_pad), out_dtype=out_dtype,
            dim_sem=("parallel", "parallel"),
            flops=4 * D * H * n_total,
            bytes_accessed=D * n_total * (x_bytes + out_bytes) + 2 * D * H * 2,
            vmem_limit=_vmem_limit(D, H, block_n, x_bytes, out_bytes))
        out = out[:, :, :T]
    else:
        # --- Tiny-T layout: fold batch into the lane axis (one bf16 transpose pass).
        x_bytes = 2
        n = B * T
        block_n = _pick_block_n(D, H, n, x_bytes, out_bytes)
        n_pad = pl.cdiv(n, block_n) * block_n
        x2 = jnp.transpose(x3, (1, 0, 2)).reshape(D, n).astype(jnp.bfloat16)
        if n_pad != n:
            x2 = jnp.pad(x2, ((0, 0), (0, n_pad - n)))
        out = _run_ffn(
            x2, w1, b1, w2, b2,
            grid=(n_pad // block_n,),
            x_spec=pl.BlockSpec((D, block_n), lambda j: (0, j)),
            o_spec=pl.BlockSpec((D, block_n), lambda j: (0, j)),
            out_shape=(D, n_pad), out_dtype=out_dtype,
            dim_sem=("parallel",),
            flops=4 * D * H * n_pad,
            bytes_accessed=D * n_pad * (x_bytes + out_bytes) + 2 * D * H * 2,
            vmem_limit=_vmem_limit(D, H, block_n, x_bytes, out_bytes))
        out = out[:, :n].reshape(D, B, T).transpose(1, 0, 2)

    return out[:, :, None, :]


# ------------------------------ pure-JAX reference ---------------------------
def reference(xs, params):
    w1, b1 = fuse_conv_bn(*params["conv1"])
    w2, b2 = fuse_conv_bn(*params["conv2"])
    x = xs[:, :, 0, :]                                         # (B, D, T)
    h = jnp.einsum("hd,bdt->bht", w1, x) + b1[None]
    h = jnp.maximum(h, 0.0)
    y = jnp.einsum("dh,bht->bdt", w2, h) + b2[None]
    return y[:, :, None, :]


# ----------------------------------- main ------------------------------------
def make_params(key, idim, hidden):
    def one(k, cout, cin):
        k1, k2, k3, k4, k5, k6 = jax.random.split(k, 6)
        w = jax.random.normal(k1, (cout, cin), jnp.float32) * 0.1
        b = jax.random.normal(k2, (cout,), jnp.float32) * 0.05
        gamma = 1.0 + 0.1 * jax.random.normal(k3, (cout,), jnp.float32)
        beta = 0.05 * jax.random.normal(k4, (cout,), jnp.float32)
        mean = 0.05 * jax.random.normal(k5, (cout,), jnp.float32)
        var = jnp.abs(jax.random.normal(k6, (cout,), jnp.float32)) * 0.1 + 0.9
        return (w, b, gamma, beta, mean, var)

    k1, k2 = jax.random.split(key)
    return {"conv1": one(k1, hidden, idim), "conv2": one(k2, idim, hidden)}


if __name__ == "__main__":
    IDIM, HIDDEN = 32, 64
    root = jax.random.PRNGKey(0)
    kp, kx1, kx2 = jax.random.split(root, 3)

    params = make_params(kp, IDIM, HIDDEN)
    fn = jax.jit(positionwise_feed_forward)

    # Case 1: tiny T (16)  -> batch-folded lane layout.
    # Case 2: T = 384      -> direct (B, D, T) layout, no wrapper transposes.
    for kx, T in ((kx1, 16), (kx2, 384)):
        xs = jax.random.normal(kx, (2, IDIM, 1, T), jnp.float32)
        out = jax.block_until_ready(fn(xs, params))
        ref = reference(xs, params)
        assert out.shape == (2, IDIM, 1, T)
        # bf16 MXU inputs + bf16 output store vs pure-f32 reference
        assert jnp.allclose(out.astype(jnp.float32), ref, rtol=2e-2, atol=2e-2)

    print("KERNEL_OK")
</pallas_src>

<mosaic_0001>
module attributes {stable_mosaic.version = 11 : i64} {
  func.func @_ffn_kernel(%arg0: i32, %arg1: memref<32x128xbf16, #tpu.memory_space<vmem>>, %arg2: memref<64x32xbf16, #tpu.memory_space<vmem>>, %arg3: memref<64x1xf32, #tpu.memory_space<vmem>>, %arg4: memref<32x64xbf16, #tpu.memory_space<vmem>>, %arg5: memref<32x1xf32, #tpu.memory_space<vmem>>, %arg6: memref<32x128xbf16, #tpu.memory_space<vmem>>) attributes {dimension_semantics = [#tpu.dimension_semantics<parallel>], iteration_bounds = array<i64: 1>, scalar_prefetch = 0 : i64, scratch_operands = 0 : i64, tpu.core_type = #tpu.core_type<tc>, window_params = [{transform_indices = @transform_0, window_bounds = array<i64: 32, 128>}, {pipeline_mode = #tpu.pipeline_mode<synchronous>, transform_indices = @transform_1, window_bounds = array<i64: 64, 32>}, {pipeline_mode = #tpu.pipeline_mode<synchronous>, transform_indices = @transform_2, window_bounds = array<i64: 64, 1>}, {pipeline_mode = #tpu.pipeline_mode<synchronous>, transform_indices = @transform_3, window_bounds = array<i64: 32, 64>}, {pipeline_mode = #tpu.pipeline_mode<synchronous>, transform_indices = @transform_4, window_bounds = array<i64: 32, 1>}, {transform_indices = @transform_5, window_bounds = array<i64: 32, 128>}]} {
    %c0 = arith.constant 0 : index
    %c0_0 = arith.constant 0 : index
    %0 = vector.load %arg1[%c0, %c0_0] : memref<32x128xbf16, #tpu.memory_space<vmem>>, vector<32x128xbf16>
    %c0_1 = arith.constant 0 : index
    %c0_2 = arith.constant 0 : index
    %1 = vector.load %arg2[%c0_1, %c0_2] : memref<64x32xbf16, #tpu.memory_space<vmem>>, vector<64x32xbf16>
    %cst = arith.constant dense<0.000000e+00> : vector<64x128xf32>
    %2 = tpu.matmul %1, %0, %cst {dimension_numbers = #tpu.dot_dimension_numbers<[1], [0], [0], [1], [0, 0, 1, 1], [], []>} : vector<64x32xbf16>, vector<32x128xbf16>, vector<64x128xf32> -> vector<64x128xf32>
    %c0_3 = arith.constant 0 : index
    %c0_4 = arith.constant 0 : index
    %3 = vector.load %arg3[%c0_3, %c0_4] : memref<64x1xf32, #tpu.memory_space<vmem>>, vector<64x1xf32>
    %4 = vector.broadcast %3 : vector<64x1xf32> to vector<64x128xf32>
    %5 = arith.addf %2, %4 : vector<64x128xf32>
    %cst_5 = arith.constant 0.000000e+00 : f32
    %6 = vector.broadcast %cst_5 : f32 to vector<64x128xf32>
    %7 = arith.maximumf %5, %6 : vector<64x128xf32>
    %c0_6 = arith.constant 0 : index
    %c0_7 = arith.constant 0 : index
    %8 = vector.load %arg4[%c0_6, %c0_7] : memref<32x64xbf16, #tpu.memory_space<vmem>>, vector<32x64xbf16>
    %9 = arith.truncf %7 : vector<64x128xf32> to vector<64x128xbf16>
    %cst_8 = arith.constant dense<0.000000e+00> : vector<32x128xf32>
    %10 = tpu.matmul %8, %9, %cst_8 {dimension_numbers = #tpu.dot_dimension_numbers<[1], [0], [0], [1], [0, 0, 1, 1], [], []>} : vector<32x64xbf16>, vector<64x128xbf16>, vector<32x128xf32> -> vector<32x128xf32>
    %c0_9 = arith.constant 0 : index
    %c0_10 = arith.constant 0 : index
    %11 = vector.load %arg5[%c0_9, %c0_10] : memref<32x1xf32, #tpu.memory_space<vmem>>, vector<32x1xf32>
    %12 = vector.broadcast %11 : vector<32x1xf32> to vector<32x128xf32>
    %13 = arith.addf %10, %12 : vector<32x128xf32>
    %14 = arith.truncf %13 : vector<32x128xf32> to vector<32x128xbf16>
    %c0_11 = arith.constant 0 : index
    %c0_12 = arith.constant 0 : index
    %15 = vector.load %arg6[%c0_11, %c0_12] : memref<32x128xbf16, #tpu.memory_space<vmem>>, vector<32x128xbf16>
    tpu.vector_store %arg6[%c0_11, %c0_12], %14 {strides = array<i32>} : memref<32x128xbf16, #tpu.memory_space<vmem>>, vector<32x128xbf16>,
    return
  }
  func.func @transform_0(%arg0: i32) -> (i32, i32) {
    %c0_i32 = arith.constant 0 : i32
    %c0_i32_0 = arith.constant 0 : i32
    return %c0_i32, %arg0 : i32, i32
  }
  func.func @transform_1(%arg0: i32) -> (i32, i32) {
    %c0_i32 = arith.constant 0 : i32
    %c0_i32_0 = arith.constant 0 : i32
    %c0_i32_1 = arith.constant 0 : i32
    return %c0_i32, %c0_i32_0 : i32, i32
  }
  func.func @transform_2(%arg0: i32) -> (i32, i32) {
    %c0_i32 = arith.constant 0 : i32
    %c0_i32_0 = arith.constant 0 : i32
    %c0_i32_1 = arith.constant 0 : i32
    return %c0_i32, %c0_i32_0 : i32, i32
  }
  func.func @transform_3(%arg0: i32) -> (i32, i32) {
    %c0_i32 = arith.constant 0 : i32
    %c0_i32_0 = arith.constant 0 : i32
    %c0_i32_1 = arith.constant 0 : i32
    return %c0_i32, %c0_i32_0 : i32, i32
  }
  func.func @transform_4(%arg0: i32) -> (i32, i32) {
    %c0_i32 = arith.constant 0 : i32
    %c0_i32_0 = arith.constant 0 : i32
    %c0_i32_1 = arith.constant 0 : i32
    return %c0_i32, %c0_i32_0 : i32, i32
  }
  func.func @transform_5(%arg0: i32) -> (i32, i32) {
    %c0_i32 = arith.constant 0 : i32
    %c0_i32_0 = arith.constant 0 : i32
    return %c0_i32, %arg0 : i32, i32
  }
}

</mosaic_0001>

<llo_original>
// kernel: positionwise_feed_forward.1
$region0: #{positionwise_feed_forward.1}
  #allocation0 [shape = 'u32[]', space=smem, size = 0x4, offset = 0x4, fixed_abs, tag = 'smem constant byte address 0x4 - core index']
  #allocation1 [shape = 'u32[144,128]{1,0:T(1,128)}', space=vmem, size = 0x12000, scoped, tag = 'internal scratch']
  %s0 = inlined_call_operand.vmem [shape: bf16[32,128], index: 0, kind: input, shape index: {}]
  %s1 = inlined_call_operand.vmem [shape: bf16[64,32], index: 1, kind: input, shape index: {}]
  %s2 = inlined_call_operand.vmem [shape: f32[64,1], index: 2, kind: input, shape index: {}]
  %s3 = inlined_call_operand.vmem [shape: bf16[32,64], index: 3, kind: input, shape index: {}]
  %s4 = inlined_call_operand.vmem [shape: f32[32,1], index: 4, kind: input, shape index: {}]
  %s5 = inlined_call_operand.vmem [shape: bf16[32,128], index: 5, kind: output, shape index: {}]
  %s6 = sld [smem:[#allocation0]]
  $region30: #{positionwise_feed_forward.1} parent=0
    _
  %s8 = ssub.s32 1, %s6
  %s9 = scalar_select 0, %s8, %s6
  // Predicated region
  $region2: #{positionwise_feed_forward.1} parent=0 // pred_check
    _
  $region3: #{positionwise_feed_forward.1} parent=0 // pred_check_branch
    %11 = sbr.rel (0) target = $region5
  $region4: #{positionwise_feed_forward.1} parent=0 // pred_region
    _
  $region5: #{positionwise_feed_forward.1} parent=0 // pred_fallthru
    _
  // Predicated region
  $region6: #{positionwise_feed_forward.1} parent=0 // pred_check
    _
  $region7: #{positionwise_feed_forward.1} parent=0 // pred_check_branch
    %13 = sbr.rel (0) target = $region9
  $region8: #{positionwise_feed_forward.1} parent=0 // pred_region
    _
  $region9: #{positionwise_feed_forward.1} parent=0 // pred_fallthru
    _
  // Predicated region
  $region10: #{positionwise_feed_forward.1} parent=0 // pred_check
    _
  $region11: #{positionwise_feed_forward.1} parent=0 // pred_check_branch
    %15 = sbr.rel (0) target = $region13
  $region12: #{positionwise_feed_forward.1} parent=0 // pred_region
    _
  $region13: #{positionwise_feed_forward.1} parent=0 // pred_fallthru
    _
  // Predicated region
  $region14: #{positionwise_feed_forward.1} parent=0 // pred_check
    _
  $region15: #{positionwise_feed_forward.1} parent=0 // pred_check_branch
    %17 = sbr.rel (0) target = $region17
  $region16: #{positionwise_feed_forward.1} parent=0 // pred_region
    _
  $region17: #{positionwise_feed_forward.1} parent=0 // pred_fallthru
    _
  // Predicated region
  $region18: #{positionwise_feed_forward.1} parent=0 // pred_check
    _
  $region19: #{positionwise_feed_forward.1} parent=0 // pred_check_branch
    %19 = sbr.rel (0) target = $region21
  $region20: #{positionwise_feed_forward.1} parent=0 // pred_region
    _
  $region21: #{positionwise_feed_forward.1} parent=0 // pred_fallthru
    _
  %v21 = vld [vmem:[%s0] sm:$0xf]
  %v22 = vld [vmem:[%s0 + $0x4] sm:$0xf]
  %v23 = vld [vmem:[%s0 + $0x8] sm:$0xf]
  %v24 = vld [vmem:[%s0 + $0xc] sm:$0xf]
  %v25 = vld [vmem:[%s1] sm:$0xf]
  %v26 = vld [vmem:[%s1 + $0x4] sm:$0xf]
  %v27 = vld [vmem:[%s1 + $0x8] sm:$0xf]
  %v28 = vld [vmem:[%s1 + $0xc] sm:$0xf]
  %v29 = vld [vmem:[%s1 + $0x10] sm:$0xf]
  %v30 = vld [vmem:[%s1 + $0x14] sm:$0xf]
  %v31 = vld [vmem:[%s1 + $0x18] sm:$0xf]
  %v32 = vld [vmem:[%s1 + $0x1c] sm:$0xf]
  %v33 = vld [vmem:[%s2] sm:$0xff]
  %v34 = vld [vmem:[%s2 + $0x8] sm:$0xff]
  %v35 = vld [vmem:[%s2 + $0x10] sm:$0xff]
  %v36 = vld [vmem:[%s2 + $0x18] sm:$0xff]
  %v37 = vld [vmem:[%s2 + $0x20] sm:$0xff]
  %v38 = vld [vmem:[%s2 + $0x28] sm:$0xff]
  %v39 = vld [vmem:[%s2 + $0x30] sm:$0xff]
  %v40 = vld [vmem:[%s2 + $0x38] sm:$0xff]
  %42 = vset.pattern.permute.xlu0 0
  %43 = vperm.xlu0 %42, %v33
  %v44 = vpop.permute.xlu0 %43
  %47 = vset.pattern.permute.xlu0 0
  %48 = vperm.xlu0 %47, %v34
  %v49 = vpop.permute.xlu0 %48
  %52 = vset.pattern.permute.xlu0 0
  %53 = vperm.xlu0 %52, %v35
  %v54 = vpop.permute.xlu0 %53
  %57 = vset.pattern.permute.xlu0 0
  %58 = vperm.xlu0 %57, %v36
  %v59 = vpop.permute.xlu0 %58
  %62 = vset.pattern.permute.xlu0 0
  %63 = vperm.xlu0 %62, %v37
  %v64 = vpop.permute.xlu0 %63
  %67 = vset.pattern.permute.xlu0 0
  %68 = vperm.xlu0 %67, %v38
  %v69 = vpop.permute.xlu0 %68
  %72 = vset.pattern.permute.xlu0 0
  %73 = vperm.xlu0 %72, %v39
  %v74 = vpop.permute.xlu0 %73
  %77 = vset.pattern.permute.xlu0 0
  %78 = vperm.xlu0 %77, %v40
  %v79 = vpop.permute.xlu0 %78
  %v89 = vunpack.c.l.b16 %v25
  %v90 = vunpack.c.l.b16 %v26
  %v91 = vunpack.c.l.b16 %v27
  %v92 = vunpack.c.l.b16 %v28
  %v93 = vunpack.c.l.b16 %v29
  %v94 = vunpack.c.l.b16 %v30
  %v95 = vunpack.c.l.b16 %v31
  %v96 = vunpack.c.l.b16 %v32
  %v97 = vpack.c.b16 %v90, %v89
  %v98 = vpack.c.b16 %v92, %v91
  %v99 = vpack.c.b16 %v94, %v93
  %v100 = vpack.c.b16 %v96, %v95
  %v105 = vunpack.c.l.b16 %v21
  %v106 = vunpack.c.l.b16 %v22
  %v107 = vunpack.c.l.b16 %v23
  %v108 = vunpack.c.l.b16 %v24
  %v109 = vpack.c.b16 %v106, %v105
  %v110 = vpack.c.b16 %v108, %v107
  %vm113 = vcmask 261120
  %v115 = vsel %vm113, %v97, 0
  %v118 = vsel %vm113, %v98, 0
  %v121 = vsel %vm113, %v99, 0
  %v124 = vsel %vm113, %v100, 0
  %126 = vmatprep.subr.bf16.mxu0 0
  %127 = vmatpush1.bf16.msra.mxu0 %v109
  %128 = vmatprep.subr.bf16.mxu0 0
  %129 = vmatpush1.bf16.msra.mxu0 %v110
  %130 = vmatprep.subr.bf16.mxu0 0
  %131 = vmatpush1.bf16.msra.mxu0 0
  %132 = vmatprep.subr.bf16.mxu0 0
  %133 = vmatpush1.bf16.msra.mxu0 0
  %134 = vmatprep.subr.bf16.mxu0 0
  %135 = vmatpush1.bf16.msra.mxu0 0
  %136 = vmatprep.subr.bf16.mxu0 0
  %137 = vmatpush1.bf16.msra.mxu0 0
  %138 = vmatprep.subr.bf16.mxu0 0
  %139 = vmatpush1.bf16.msra.mxu0 0
  %140 = vmatprep.subr.bf16.mxu0 0
  %141 = vmatpush1.bf16.msra.mxu0 0
  %142 = vmatprep.subr.bf16.mxu0 0
  %143 = vmatpush1.bf16.msra.mxu0 0
  %144 = vmatprep.subr.bf16.mxu0 0
  %145 = vmatpush1.bf16.msra.mxu0 0
  %146 = vmatprep.subr.bf16.mxu0 0
  %147 = vmatpush1.bf16.msra.mxu0 0
  %148 = vmatprep.subr.bf16.mxu0 0
  %149 = vmatpush1.bf16.msra.mxu0 0
  %150 = vmatprep.subr.bf16.mxu0 0
  %151 = vmatpush1.bf16.msra.mxu0 0
  %152 = vmatprep.subr.bf16.mxu0 0
  %153 = vmatpush1.bf16.msra.mxu0 0
  %154 = vmatprep.subr.bf16.mxu0 0
  %155 = vmatpush1.bf16.msra.mxu0 0
  %156 = vmatprep.subr.bf16.mxu0 0
  %157 = vmatpush1.bf16.msra.mxu0 0
  %158 = vmatprep.mubr.bf16.mxu0 0
  %159 = vmatmul.mubr.bf16.gmra.mrb[0].mxu0 %v115
  %v160 = vpop.f32.mrb[0].mxu0
  %v161 = vadd.f32 %v44, %v160
  %v162 = vpop.f32.mrb[0].mxu0
  %v163 = vpop.f32.mrb[0].mxu0
  %v164 = vadd.f32 %v49, %v163
  %v165 = vpop.f32.mrb[0].mxu0
  %166 = vmatprep.mubr.bf16.mxu0 0
  %167 = vmatmul.mubr.bf16.gmra.mrb[0].mxu0 %v118
  %v168 = vpop.f32.mrb[0].mxu0
  %v169 = vadd.f32 %v54, %v168
  %v170 = vpop.f32.mrb[0].mxu0
  %v171 = vpop.f32.mrb[0].mxu0
  %v172 = vadd.f32 %v59, %v171
  %v173 = vpop.f32.mrb[0].mxu0
  %174 = vmatprep.mubr.bf16.mxu0 0
  %175 = vmatmul.mubr.bf16.gmra.mrb[0].mxu0 %v121
  %v176 = vpop.f32.mrb[0].mxu0
  %v177 = vadd.f32 %v64, %v176
  %v178 = vpop.f32.mrb[0].mxu0
  %v179 = vpop.f32.mrb[0].mxu0
  %v180 = vadd.f32 %v69, %v179
  %v181 = vpop.f32.mrb[0].mxu0
  %182 = vmatprep.mubr.bf16.mxu0 0
  %183 = vmatmul.mubr.bf16.gmra.mrb[0].mxu0 %v124
  %v184 = vpop.f32.mrb[0].mxu0
  %v185 = vadd.f32 %v74, %v184
  %v186 = vpop.f32.mrb[0].mxu0
  %v187 = vpop.f32.mrb[0].mxu0
  %v188 = vadd.f32 %v79, %v187
  %v189 = vpop.f32.mrb[0].mxu0
  %190 = vdwg.mxu0
  %v191 = vmax.f32 %v161, 0.0
  %v192 = vmax.f32 %v164, 0.0
  %v193 = vmax.f32 %v169, 0.0
  %v194 = vmax.f32 %v172, 0.0
  %v195 = vmax.f32 %v177, 0.0
  %v196 = vmax.f32 %v180, 0.0
  %v197 = vmax.f32 %v185, 0.0
  %v198 = vmax.f32 %v188, 0.0
  %v199 = vld [vmem:[%s3] sm:$0xf]
  %v200 = vld [vmem:[%s3 + $0x4] sm:$0xf]
  %v201 = vld [vmem:[%s3 + $0x8] sm:$0xf]
  %v202 = vld [vmem:[%s3 + $0xc] sm:$0xf]
  %v203 = vpack.c.bf16 %v192, %v191
  %v204 = vpack.c.bf16 %v194, %v193
  %v205 = vpack.c.bf16 %v196, %v195
  %v206 = vpack.c.bf16 %v198, %v197
  %v207 = vld [vmem:[%s4] sm:$0xff]
  %v208 = vld [vmem:[%s4 + $0x8] sm:$0xff]
  %v209 = vld [vmem:[%s4 + $0x10] sm:$0xff]
  %v210 = vld [vmem:[%s4 + $0x18] sm:$0xff]
  %212 = vset.pattern.permute.xlu0 0
  %213 = vperm.xlu0 %212, %v207
  %v214 = vpop.permute.xlu0 %213
  %217 = vset.pattern.permute.xlu0 0
  %218 = vperm.xlu0 %217, %v208
  %v219 = vpop.permute.xlu0 %218
  %222 = vset.pattern.permute.xlu0 0
  %223 = vperm.xlu0 %222, %v209
  %v224 = vpop.permute.xlu0 %223
  %227 = vset.pattern.permute.xlu0 0
  %228 = vperm.xlu0 %227, %v210
  %v229 = vpop.permute.xlu0 %228
  %v235 = vunpack.c.l.b16 %v199
  %v236 = vunpack.c.l.b16 %v200
  %v237 = vunpack.c.l.b16 %v201
  %v238 = vunpack.c.l.b16 %v202
  %v239 = vpack.c.b16 %v236, %v235
  %v240 = vpack.c.b16 %v238, %v237
  %vm241 = vcmask 523264
  %v243 = vsel %vm241, %v239, 0
  %v246 = vsel %vm241, %v240, 0
  %248 = vmatprep.subr.bf16.mxu0 0
  %249 = vmatpush1.bf16.msra.mxu0 %v203
  %250 = vmatprep.subr.bf16.mxu0 0
  %251 = vmatpush1.bf16.msra.mxu0 %v204
  %252 = vmatprep.subr.bf16.mxu0 0
  %253 = vmatpush1.bf16.msra.mxu0 %v205
  %254 = vmatprep.subr.bf16.mxu0 0
  %255 = vmatpush1.bf16.msra.mxu0 %v206
  %256 = vmatprep.subr.bf16.mxu0 0
  %257 = vmatpush1.bf16.msra.mxu0 0
  %258 = vmatprep.subr.bf16.mxu0 0
  %259 = vmatpush1.bf16.msra.mxu0 0
  %260 = vmatprep.subr.bf16.mxu0 0
  %261 = vmatpush1.bf16.msra.mxu0 0
  %262 = vmatprep.subr.bf16.mxu0 0
  %263 = vmatpush1.bf16.msra.mxu0 0
  %264 = vmatprep.subr.bf16.mxu0 0
  %265 = vmatpush1.bf16.msra.mxu0 0
  %266 = vmatprep.subr.bf16.mxu0 0
  %267 = vmatpush1.bf16.msra.mxu0 0
  %268 = vmatprep.subr.bf16.mxu0 0
  %269 = vmatpush1.bf16.msra.mxu0 0
  %270 = vmatprep.subr.bf16.mxu0 0
  %271 = vmatpush1.bf16.msra.mxu0 0
  %272 = vmatprep.subr.bf16.mxu0 0
  %273 = vmatpush1.bf16.msra.mxu0 0
  %274 = vmatprep.subr.bf16.mxu0 0
  %275 = vmatpush1.bf16.msra.mxu0 0
  %276 = vmatprep.subr.bf16.mxu0 0
  %277 = vmatpush1.bf16.msra.mxu0 0
  %278 = vmatprep.subr.bf16.mxu0 0
  %279 = vmatpush1.bf16.msra.mxu0 0
  %280 = vmatprep.mubr.bf16.mxu0 0
  %281 = vmatmul.mubr.bf16.gmra.mrb[0].mxu0 %v243
  %v282 = vpop.f32.mrb[0].mxu0
  %v283 = vadd.f32 %v214, %v282
  %v284 = vpop.f32.mrb[0].mxu0
  %v285 = vpop.f32.mrb[0].mxu0
  %v286 = vadd.f32 %v219, %v285
  %v287 = vpop.f32.mrb[0].mxu0
  %288 = vmatprep.mubr.bf16.mxu0 0
  %289 = vmatmul.mubr.bf16.gmra.mrb[0].mxu0 %v246
  %v290 = vpop.f32.mrb[0].mxu0
  %v291 = vadd.f32 %v224, %v290
  %v292 = vpop.f32.mrb[0].mxu0
  %v293 = vpop.f32.mrb[0].mxu0
  %v294 = vadd.f32 %v229, %v293
  %v295 = vpop.f32.mrb[0].mxu0
  %296 = vdwg.mxu0
  %v297 = vpack.c.bf16 %v286, %v283
  %v298 = vpack.c.bf16 %v294, %v291
  %v301 = vunpack.c.l.b16 %v297
  %v302 = vunpack.c.h.b16 %v297
  %v303 = vunpack.c.l.b16 %v298
  %v304 = vunpack.c.h.b16 %v298
  %v305 = vpack.c.b16 %v301, %v301
  %v306 = vpack.c.b16 %v302, %v302
  %v307 = vpack.c.b16 %v303, %v303
  %v308 = vpack.c.b16 %v304, %v304
  %313 = vst [vmem:[%s5] sm:$0xf] %v305
  %314 = vst [vmem:[%s5 + $0x4] sm:$0xf] %v306
  %315 = vst [vmem:[%s5 + $0x8] sm:$0xf] %v307
  %316 = vst [vmem:[%s5 + $0xc] sm:$0xf] %v308
  // Predicated region
  $region22: #{positionwise_feed_forward.1} parent=0 // pred_check
    _
  $region23: #{positionwise_feed_forward.1} parent=0 // pred_check_branch
    %318 = sbr.rel (0) target = $region25
  $region24: #{positionwise_feed_forward.1} parent=0 // pred_region
    _
  $region25: #{positionwise_feed_forward.1} parent=0 // pred_fallthru
    _
  // Predicated region
  $region26: #{positionwise_feed_forward.1} parent=0 // pred_check
    _
  $region27: #{positionwise_feed_forward.1} parent=0 // pred_check_branch
    %320 = sbr.rel (0) target = $region29
  $region28: #{positionwise_feed_forward.1} parent=0 // pred_region
    _
  $region29: #{positionwise_feed_forward.1} parent=0 // pred_fallthru
    _

</llo_original>
